<compile_context>
chip_gen: v7x
topology: tpu7x:2x2x1
jax: 0.10.0
libtpu: 0.0.40
codegen_flags: <defaults>
</compile_context>

<pallas_src>
import functools
import math

import jax
import jax.numpy as jnp
from jax.experimental import pallas as pl
from jax.experimental.pallas import tpu as pltpu


def _mlp_kernel(x_ref,
                w1_ref, b1_ref,
                w2_ref, b2_ref,
                w3_ref, b3_ref,
                w4_ref, b4_ref,
                w5_ref, b5_ref,
                o_ref,
                *, bf16_elementwise):
    """Fused forward pass for one batch tile (batch on the lane axis)."""
    ew = jnp.bfloat16 if bf16_elementwise else jnp.float32

    def layer(h_act, w_ref, b_ref):
        # MXU: bf16 operands, f32 accumulation.
        acc = jnp.dot(w_ref[...], h_act.astype(jnp.bfloat16),
                      preferred_element_type=jnp.float32)
        # Bias + ReLU on the VPU (bf16 on v6e/v7x halves the VALU op count).
        return jnp.maximum(acc.astype(ew) + b_ref[...], 0.0)

    h = layer(x_ref[...], w1_ref, b1_ref)        # [128, tb]
    h = layer(h, w2_ref, b2_ref)                 # [128, tb]
    h = layer(h, w3_ref, b3_ref)                 # [ 64, tb]
    h = layer(h, w4_ref, b4_ref)                 # [ 32, tb]

    # Output Linear(32, 1) + Sigmoid: broadcast-multiply + f32 sublane reduce,
    # yielding the lane-dense [1, tile_b] row directly.
    logits = jnp.sum(h.astype(jnp.float32) * w5_ref[...],
                     axis=0, keepdims=True) + b5_ref[...]
    o_ref[...] = jax.nn.sigmoid(logits)          # [1, tb] f32


def _round_up(n, m):
    return -(-n // m) * m


_TILE_MAX = 8192  # rows; keeps live intermediates well under 64 MiB scoped VMEM


def _default_tile(batch):
    """Adaptive batch tile (multiple of 128)."""
    b128 = _round_up(max(batch, 1), 128)
    if b128 <= 2048:
        # Small batch: a single tile; splitting would only add step overhead.
        return b128
    # Large batch: at least 2 tiles (v7x dual-TC / megacore sharding), capped
    # at _TILE_MAX so per-tile intermediates stay comfortably inside VMEM.
    return min(_TILE_MAX, _round_up(-(-batch // 2), 128))


def _bf16_elementwise_default():
    """bf16 VALU exists on v6e/v7x; v5e (and earlier) would only add casts."""
    try:
        kind = jax.devices()[0].device_kind.lower()
    except Exception:
        return False
    return ("v6" in kind) or ("v7" in kind)


def primary_track_shower_forward(x, params, *, tile_b=None, bf16_elementwise=None):
    """x: [B, nVariables] (any float dtype) -> [B, 1] float32 probabilities."""
    x = jnp.asarray(x)
    B, nV = x.shape

    if bf16_elementwise is None:
        bf16_elementwise = _bf16_elementwise_default()
    if tile_b is None:
        tile_b = _default_tile(B)
    tile_b = _round_up(tile_b, 128)
    B_pad = _round_up(B, tile_b)
    num_tiles = B_pad // tile_b

    # Host-side prep, fused by XLA into one pass: f32 -> bf16 cast + zero-pad
    # of the ragged tail + transpose so the batch lands on the lane axis.
    xb = x.astype(jnp.float32).astype(jnp.bfloat16)
    if B_pad != B:
        xb = jnp.pad(xb, ((0, B_pad - B), (0, 0)))
    x_t = xb.T                                    # [nV, B_pad] bf16

    (w1, b1), (w2, b2), (w3, b3), (w4, b4), (w5, b5) = params
    ew = jnp.bfloat16 if bf16_elementwise else jnp.float32
    # Hidden-layer weights stored bf16 (MXU operands); biases in the
    # elementwise dtype; output layer kept in f32 for the VPU reduce.
    w1b, w2b, w3b, w4b = (w.astype(jnp.bfloat16) for w in (w1, w2, w3, w4))
    b1c, b2c, b3c, b4c = (b.reshape(-1, 1).astype(ew) for b in (b1, b2, b3, b4))
    w5c = w5.reshape(-1, 1).astype(jnp.float32)   # [32, 1]
    b5c = b5.reshape(1, 1).astype(jnp.float32)    # [1, 1]

    def full_spec(a):
        # Constant index_map: block never changes across grid steps, so the
        # weights/biases are DMA'd once and stay resident in VMEM.
        return pl.BlockSpec(a.shape, lambda i: (0, 0))

    kernel = functools.partial(_mlp_kernel, bf16_elementwise=bf16_elementwise)

    out = pl.pallas_call(
        kernel,
        out_shape=jax.ShapeDtypeStruct((1, B_pad), jnp.float32),
        grid_spec=pltpu.PrefetchScalarGridSpec(
            num_scalar_prefetch=0,
            grid=(num_tiles,),
            in_specs=[
                pl.BlockSpec((nV, tile_b), lambda i: (0, i)),   # x (bf16, transposed)
                full_spec(w1b), full_spec(b1c),
                full_spec(w2b), full_spec(b2c),
                full_spec(w3b), full_spec(b3c),
                full_spec(w4b), full_spec(b4c),
                full_spec(w5c), full_spec(b5c),
            ],
            out_specs=pl.BlockSpec((1, tile_b), lambda i: (0, i)),
        ),
        compiler_params=pltpu.CompilerParams(
            dimension_semantics=("parallel",),
            vmem_limit_bytes=64 * 1024 * 1024),   # large tiles on v5e default 16 MiB
    )(x_t, w1b, b1c, w2b, b2c, w3b, b3c, w4b, b4c, w5c, b5c)

    return out[0, :B].reshape(B, 1)


def init_params(key, n_variables):
    """PyTorch-shaped params: weights [out, in], biases [out] (all float32).

    kaiming_uniform (relu, fan_in) for hidden layers, xavier_uniform for the
    output, PyTorch-default bias init U(-1/sqrt(fan_in), 1/sqrt(fan_in)).
    """
    def kaiming_uniform(k, fan_out, fan_in):
        bound = math.sqrt(2.0) * math.sqrt(3.0 / fan_in)
        return jax.random.uniform(k, (fan_out, fan_in), jnp.float32, -bound, bound)

    def xavier_uniform(k, fan_out, fan_in):
        bound = math.sqrt(6.0 / (fan_in + fan_out))
        return jax.random.uniform(k, (fan_out, fan_in), jnp.float32, -bound, bound)

    def bias(k, fan_out, fan_in):
        bound = 1.0 / math.sqrt(fan_in)
        return jax.random.uniform(k, (fan_out,), jnp.float32, -bound, bound)

    dims = [(n_variables, 128), (128, 128), (128, 64), (64, 32), (32, 1)]
    keys = jax.random.split(key, 2 * len(dims))
    params = []
    for idx, (fi, fo) in enumerate(dims):
        kw, kb = keys[2 * idx], keys[2 * idx + 1]
        w = (kaiming_uniform if idx < len(dims) - 1 else xavier_uniform)(kw, fo, fi)
        params.append((w, bias(kb, fo, fi)))
    return params


def reference_forward_f32(x, params):
    """Pure-f32 reference matching the PyTorch module (eval mode)."""
    h = jnp.asarray(x, jnp.float32)
    for i, (w, b) in enumerate(params):
        h = h @ w.T + b
        if i < len(params) - 1:
            h = jnp.maximum(h, 0.0)
    return jax.nn.sigmoid(h)


def reference_forward_matched(x, params, *, bf16_elementwise):
    """Reference mirroring the kernel's precision recipe exactly."""
    ew = jnp.bfloat16 if bf16_elementwise else jnp.float32
    h = jnp.asarray(x, jnp.float32).astype(jnp.bfloat16)   # host-side x cast
    n = len(params)
    for i, (w, b) in enumerate(params):
        if i < n - 1:
            acc = jnp.dot(h.astype(jnp.bfloat16), w.T.astype(jnp.bfloat16),
                          preferred_element_type=jnp.float32)
            h = jnp.maximum(acc.astype(ew) + b.astype(ew), 0.0)
        else:
            logits = jnp.sum(h.astype(jnp.float32) * w.reshape(1, -1),
                             axis=-1, keepdims=True) + b
    return jax.nn.sigmoid(logits)


if __name__ == "__main__":
    n_variables = 16
    batch = 8

    key = jax.random.PRNGKey(0)
    k_param, k_x = jax.random.split(key)
    params = init_params(k_param, n_variables)
    x = jax.random.normal(k_x, (batch, n_variables), dtype=jnp.float32)

    bf16_ew = _bf16_elementwise_default()
    out = primary_track_shower_forward(x, params, bf16_elementwise=bf16_ew)
    out = jax.block_until_ready(out)
    assert out.shape == (batch, 1)

    ref_matched = reference_forward_matched(x, params, bf16_elementwise=bf16_ew)
    ref_f32 = reference_forward_f32(x, params)
    assert jnp.allclose(out, ref_matched, atol=5e-3, rtol=0.0), \
        "mismatch vs precision-matched reference"
    assert jnp.allclose(out, ref_f32, atol=5e-2, rtol=0.0), \
        "mismatch vs f32 reference"

    print("KERNEL_OK")
</pallas_src>

<mosaic_0001>
module attributes {stable_mosaic.version = 11 : i64} {
  func.func @_mlp_kernel(%arg0: i32, %arg1: memref<16x128xbf16, #tpu.memory_space<vmem>>, %arg2: memref<128x16xbf16, #tpu.memory_space<vmem>>, %arg3: memref<128x1xf32, #tpu.memory_space<vmem>>, %arg4: memref<128x128xbf16, #tpu.memory_space<vmem>>, %arg5: memref<128x1xf32, #tpu.memory_space<vmem>>, %arg6: memref<64x128xbf16, #tpu.memory_space<vmem>>, %arg7: memref<64x1xf32, #tpu.memory_space<vmem>>, %arg8: memref<32x64xbf16, #tpu.memory_space<vmem>>, %arg9: memref<32x1xf32, #tpu.memory_space<vmem>>, %arg10: memref<32x1xf32, #tpu.memory_space<vmem>>, %arg11: memref<1x1xf32, #tpu.memory_space<vmem>>, %arg12: memref<1x128xf32, #tpu.memory_space<vmem>>) attributes {dimension_semantics = [#tpu.dimension_semantics<parallel>], iteration_bounds = array<i64: 1>, scalar_prefetch = 0 : i64, scratch_operands = 0 : i64, tpu.core_type = #tpu.core_type<tc>, window_params = [{transform_indices = @transform_0, window_bounds = array<i64: 16, 128>}, {pipeline_mode = #tpu.pipeline_mode<synchronous>, transform_indices = @transform_1, window_bounds = array<i64: 128, 16>}, {pipeline_mode = #tpu.pipeline_mode<synchronous>, transform_indices = @transform_2, window_bounds = array<i64: 128, 1>}, {pipeline_mode = #tpu.pipeline_mode<synchronous>, transform_indices = @transform_3, window_bounds = array<i64: 128, 128>}, {pipeline_mode = #tpu.pipeline_mode<synchronous>, transform_indices = @transform_4, window_bounds = array<i64: 128, 1>}, {pipeline_mode = #tpu.pipeline_mode<synchronous>, transform_indices = @transform_5, window_bounds = array<i64: 64, 128>}, {pipeline_mode = #tpu.pipeline_mode<synchronous>, transform_indices = @transform_6, window_bounds = array<i64: 64, 1>}, {pipeline_mode = #tpu.pipeline_mode<synchronous>, transform_indices = @transform_7, window_bounds = array<i64: 32, 64>}, {pipeline_mode = #tpu.pipeline_mode<synchronous>, transform_indices = @transform_8, window_bounds = array<i64: 32, 1>}, {pipeline_mode = #tpu.pipeline_mode<synchronous>, transform_indices = @transform_9, window_bounds = array<i64: 32, 1>}, {pipeline_mode = #tpu.pipeline_mode<synchronous>, transform_indices = @transform_10, window_bounds = array<i64: 1, 1>}, {transform_indices = @transform_11, window_bounds = array<i64: 1, 128>}]} {
    %c0 = arith.constant 0 : index
    %c0_0 = arith.constant 0 : index
    %0 = vector.load %arg1[%c0, %c0_0] : memref<16x128xbf16, #tpu.memory_space<vmem>>, vector<16x128xbf16>
    %c0_1 = arith.constant 0 : index
    %c0_2 = arith.constant 0 : index
    %1 = vector.load %arg2[%c0_1, %c0_2] : memref<128x16xbf16, #tpu.memory_space<vmem>>, vector<128x16xbf16>
    %cst = arith.constant dense<0.000000e+00> : vector<128x128xf32>
    %2 = tpu.matmul %1, %0, %cst {dimension_numbers = #tpu.dot_dimension_numbers<[1], [0], [0], [1], [0, 0, 1, 1], [], []>} : vector<128x16xbf16>, vector<16x128xbf16>, vector<128x128xf32> -> vector<128x128xf32>
    %c0_3 = arith.constant 0 : index
    %c0_4 = arith.constant 0 : index
    %3 = vector.load %arg3[%c0_3, %c0_4] : memref<128x1xf32, #tpu.memory_space<vmem>>, vector<128x1xf32>
    %4 = vector.broadcast %3 : vector<128x1xf32> to vector<128x128xf32>
    %5 = arith.addf %2, %4 : vector<128x128xf32>
    %cst_5 = arith.constant 0.000000e+00 : f32
    %6 = vector.broadcast %cst_5 : f32 to vector<128x128xf32>
    %7 = arith.maximumf %5, %6 : vector<128x128xf32>
    %c0_6 = arith.constant 0 : index
    %c0_7 = arith.constant 0 : index
    %8 = vector.load %arg4[%c0_6, %c0_7] : memref<128x128xbf16, #tpu.memory_space<vmem>>, vector<128x128xbf16>
    %9 = arith.truncf %7 : vector<128x128xf32> to vector<128x128xbf16>
    %cst_8 = arith.constant dense<0.000000e+00> : vector<128x128xf32>
    %10 = tpu.matmul %8, %9, %cst_8 {dimension_numbers = #tpu.dot_dimension_numbers<[1], [0], [0], [1], [0, 0, 1, 1], [], []>} : vector<128x128xbf16>, vector<128x128xbf16>, vector<128x128xf32> -> vector<128x128xf32>
    %c0_9 = arith.constant 0 : index
    %c0_10 = arith.constant 0 : index
    %11 = vector.load %arg5[%c0_9, %c0_10] : memref<128x1xf32, #tpu.memory_space<vmem>>, vector<128x1xf32>
    %12 = vector.broadcast %11 : vector<128x1xf32> to vector<128x128xf32>
    %13 = arith.addf %10, %12 : vector<128x128xf32>
    %cst_11 = arith.constant 0.000000e+00 : f32
    %14 = vector.broadcast %cst_11 : f32 to vector<128x128xf32>
    %15 = arith.maximumf %13, %14 : vector<128x128xf32>
    %c0_12 = arith.constant 0 : index
    %c0_13 = arith.constant 0 : index
    %16 = vector.load %arg6[%c0_12, %c0_13] : memref<64x128xbf16, #tpu.memory_space<vmem>>, vector<64x128xbf16>
    %17 = arith.truncf %15 : vector<128x128xf32> to vector<128x128xbf16>
    %cst_14 = arith.constant dense<0.000000e+00> : vector<64x128xf32>
    %18 = tpu.matmul %16, %17, %cst_14 {dimension_numbers = #tpu.dot_dimension_numbers<[1], [0], [0], [1], [0, 0, 1, 1], [], []>} : vector<64x128xbf16>, vector<128x128xbf16>, vector<64x128xf32> -> vector<64x128xf32>
    %c0_15 = arith.constant 0 : index
    %c0_16 = arith.constant 0 : index
    %19 = vector.load %arg7[%c0_15, %c0_16] : memref<64x1xf32, #tpu.memory_space<vmem>>, vector<64x1xf32>
    %20 = vector.broadcast %19 : vector<64x1xf32> to vector<64x128xf32>
    %21 = arith.addf %18, %20 : vector<64x128xf32>
    %cst_17 = arith.constant 0.000000e+00 : f32
    %22 = vector.broadcast %cst_17 : f32 to vector<64x128xf32>
    %23 = arith.maximumf %21, %22 : vector<64x128xf32>
    %c0_18 = arith.constant 0 : index
    %c0_19 = arith.constant 0 : index
    %24 = vector.load %arg8[%c0_18, %c0_19] : memref<32x64xbf16, #tpu.memory_space<vmem>>, vector<32x64xbf16>
    %25 = arith.truncf %23 : vector<64x128xf32> to vector<64x128xbf16>
    %cst_20 = arith.constant dense<0.000000e+00> : vector<32x128xf32>
    %26 = tpu.matmul %24, %25, %cst_20 {dimension_numbers = #tpu.dot_dimension_numbers<[1], [0], [0], [1], [0, 0, 1, 1], [], []>} : vector<32x64xbf16>, vector<64x128xbf16>, vector<32x128xf32> -> vector<32x128xf32>
    %c0_21 = arith.constant 0 : index
    %c0_22 = arith.constant 0 : index
    %27 = vector.load %arg9[%c0_21, %c0_22] : memref<32x1xf32, #tpu.memory_space<vmem>>, vector<32x1xf32>
    %28 = vector.broadcast %27 : vector<32x1xf32> to vector<32x128xf32>
    %29 = arith.addf %26, %28 : vector<32x128xf32>
    %cst_23 = arith.constant 0.000000e+00 : f32
    %30 = vector.broadcast %cst_23 : f32 to vector<32x128xf32>
    %31 = arith.maximumf %29, %30 : vector<32x128xf32>
    %c0_24 = arith.constant 0 : index
    %c0_25 = arith.constant 0 : index
    %32 = vector.load %arg10[%c0_24, %c0_25] : memref<32x1xf32, #tpu.memory_space<vmem>>, vector<32x1xf32>
    %33 = vector.broadcast %32 : vector<32x1xf32> to vector<32x128xf32>
    %34 = arith.mulf %31, %33 : vector<32x128xf32>
    %cst_26 = arith.constant dense<0.000000e+00> : vector<128xf32>
    %35 = vector.multi_reduction <add>, %34, %cst_26 [0] : vector<32x128xf32> to vector<128xf32>
    %36 = vector.shape_cast %35 : vector<128xf32> to vector<1x128xf32>
    %c0_27 = arith.constant 0 : index
    %c0_28 = arith.constant 0 : index
    %37 = vector.load %arg11[%c0_27, %c0_28] : memref<1x1xf32, #tpu.memory_space<vmem>>, vector<1x1xf32>
    %38 = vector.broadcast %37 : vector<1x1xf32> to vector<1x128xf32>
    %39 = arith.addf %36, %38 : vector<1x128xf32>
    %40 = arith.negf %39 : vector<1x128xf32>
    %41 = math.exp %40 : vector<1x128xf32>
    %cst_29 = arith.constant 1.000000e+00 : f32
    %42 = vector.broadcast %cst_29 : f32 to vector<1x128xf32>
    %43 = arith.addf %42, %41 : vector<1x128xf32>
    %44 = arith.divf %42, %43 : vector<1x128xf32>
    %c0_30 = arith.constant 0 : index
    %c0_31 = arith.constant 0 : index
    %45 = vector.load %arg12[%c0_30, %c0_31] : memref<1x128xf32, #tpu.memory_space<vmem>>, vector<1x128xf32>
    tpu.vector_store %arg12[%c0_30, %c0_31], %44 {strides = array<i32>} : memref<1x128xf32, #tpu.memory_space<vmem>>, vector<1x128xf32>,
    return
  }
  func.func @transform_0(%arg0: i32) -> (i32, i32) {
    %c0_i32 = arith.constant 0 : i32
    %c0_i32_0 = arith.constant 0 : i32
    return %c0_i32, %arg0 : i32, i32
  }
  func.func @transform_1(%arg0: i32) -> (i32, i32) {
    %c0_i32 = arith.constant 0 : i32
    %c0_i32_0 = arith.constant 0 : i32
    %c0_i32_1 = arith.constant 0 : i32
    return %c0_i32, %c0_i32_0 : i32, i32
  }
  func.func @transform_2(%arg0: i32) -> (i32, i32) {
    %c0_i32 = arith.constant 0 : i32
    %c0_i32_0 = arith.constant 0 : i32
    %c0_i32_1 = arith.constant 0 : i32
    return %c0_i32, %c0_i32_0 : i32, i32
  }
  func.func @transform_3(%arg0: i32) -> (i32, i32) {
    %c0_i32 = arith.constant 0 : i32
    %c0_i32_0 = arith.constant 0 : i32
    %c0_i32_1 = arith.constant 0 : i32
    return %c0_i32, %c0_i32_0 : i32, i32
  }
  func.func @transform_4(%arg0: i32) -> (i32, i32) {
    %c0_i32 = arith.constant 0 : i32
    %c0_i32_0 = arith.constant 0 : i32
    %c0_i32_1 = arith.constant 0 : i32
    return %c0_i32, %c0_i32_0 : i32, i32
  }
  func.func @transform_5(%arg0: i32) -> (i32, i32) {
    %c0_i32 = arith.constant 0 : i32
    %c0_i32_0 = arith.constant 0 : i32
    %c0_i32_1 = arith.constant 0 : i32
    return %c0_i32, %c0_i32_0 : i32, i32
  }
  func.func @transform_6(%arg0: i32) -> (i32, i32) {
    %c0_i32 = arith.constant 0 : i32
    %c0_i32_0 = arith.constant 0 : i32
    %c0_i32_1 = arith.constant 0 : i32
    return %c0_i32, %c0_i32_0 : i32, i32
  }
  func.func @transform_7(%arg0: i32) -> (i32, i32) {
    %c0_i32 = arith.constant 0 : i32
    %c0_i32_0 = arith.constant 0 : i32
    %c0_i32_1 = arith.constant 0 : i32
    return %c0_i32, %c0_i32_0 : i32, i32
  }
  func.func @transform_8(%arg0: i32) -> (i32, i32) {
    %c0_i32 = arith.constant 0 : i32
    %c0_i32_0 = arith.constant 0 : i32
    %c0_i32_1 = arith.constant 0 : i32
    return %c0_i32, %c0_i32_0 : i32, i32
  }
  func.func @transform_9(%arg0: i32) -> (i32, i32) {
    %c0_i32 = arith.constant 0 : i32
    %c0_i32_0 = arith.constant 0 : i32
    %c0_i32_1 = arith.constant 0 : i32
    return %c0_i32, %c0_i32_0 : i32, i32
  }
  func.func @transform_10(%arg0: i32) -> (i32, i32) {
    %c0_i32 = arith.constant 0 : i32
    %c0_i32_0 = arith.constant 0 : i32
    %c0_i32_1 = arith.constant 0 : i32
    return %c0_i32, %c0_i32_0 : i32, i32
  }
  func.func @transform_11(%arg0: i32) -> (i32, i32) {
    %c0_i32 = arith.constant 0 : i32
    %c0_i32_0 = arith.constant 0 : i32
    return %c0_i32, %arg0 : i32, i32
  }
}

</mosaic_0001>

<llo_original>
// kernel: tpu_custom_call.1
$region0: #{tpu_custom_call.1}
  #allocation0 [shape = 'u32[]', space=smem, size = 0x4, offset = 0x4, fixed_abs, tag = 'smem constant byte address 0x4 - core index']
  #allocation1 [shape = 'u32[144,128]{1,0:T(1,128)}', space=vmem, size = 0x12000, scoped, tag = 'internal scratch']
  #allocation2 [shape = 'f32[1,1]{1,0:T(1,128)S(1)}', space=vmem, size = 0x200, scoped, tag = 'scoped memory for tpu_custom_call.1']
  %s0 = inlined_call_operand.hbm [shape: bf16[16,128], index: 0, kind: input, shape index: {}]
  %s1 = inlined_call_operand.hbm [shape: bf16[128,16], index: 1, kind: input, shape index: {}]
  %s2 = inlined_call_operand.hbm [shape: f32[128,1], index: 2, kind: input, shape index: {}]
  %s3 = inlined_call_operand.hbm [shape: bf16[128,128], index: 3, kind: input, shape index: {}]
  %s4 = inlined_call_operand.hbm [shape: f32[128,1], index: 4, kind: input, shape index: {}]
  %s5 = inlined_call_operand.hbm [shape: bf16[64,128], index: 5, kind: input, shape index: {}]
  %s6 = inlined_call_operand.hbm [shape: f32[64,1], index: 6, kind: input, shape index: {}]
  %s7 = inlined_call_operand.hbm [shape: bf16[32,64], index: 7, kind: input, shape index: {}]
  %s8 = inlined_call_operand.hbm [shape: f32[32,1], index: 8, kind: input, shape index: {}]
  %s9 = inlined_call_operand.hbm [shape: f32[32,1], index: 9, kind: input, shape index: {}]
  %s10 = inlined_call_operand.<no memory space> [shape: f32[1,1], index: 10, kind: input, shape index: {}]
  %s11 = inlined_call_operand.hbm [shape: f32[1,128], index: 11, kind: output, shape index: {}]
  %s12 = sld [smem:[#allocation0]]
  $region94: #{tpu_custom_call.1} parent=0
    _
  %s14 = ssub.s32 1, %s12
  %s15 = scalar_select 0, %s14, %s12
  %v16 = vstv %s10
  %17 = vst [vmem:[#allocation2] sm:$0x1] %v16
  $region1: #{tpu_custom_call.1} parent=0
    #allocation3 [shape = 'u8[4096]{0}', space=vmem, size = 0x1000, scoped, tag = 'input window, operand 0, single buffered']
    #allocation4 [shape = 's32[1]{0}', space=sflag, size = 0x4, scoped, tag = 'scoped memory for tpu_custom_call.1']
    #allocation5 [shape = 's32[1]{0}', space=sflag, size = 0x4, scoped, tag = 'scoped memory for tpu_custom_call.1']
    #allocation6 [shape = 'u8[32768]{0}', space=vmem, size = 0x8000, scoped, tag = 'input window, operand 1, single buffered']
    #allocation7 [shape = 's32[1]{0}', space=sflag, size = 0x4, scoped, tag = 'scoped memory for tpu_custom_call.1']
    #allocation8 [shape = 'u8[65536]{0}', space=vmem, size = 0x10000, scoped, tag = 'input window, operand 2, single buffered']
    #allocation9 [shape = 'u8[32768]{0}', space=vmem, size = 0x8000, scoped, tag = 'input window, operand 3, single buffered']
    #allocation10 [shape = 's32[1]{0}', space=sflag, size = 0x4, scoped, tag = 'scoped memory for tpu_custom_call.1']
    #allocation11 [shape = 'u8[65536]{0}', space=vmem, size = 0x10000, scoped, tag = 'input window, operand 4, single buffered']
    #allocation12 [shape = 'u8[16384]{0}', space=vmem, size = 0x4000, scoped, tag = 'input window, operand 5, single buffered']
    #allocation13 [shape = 's32[1]{0}', space=sflag, size = 0x4, scoped, tag = 'scoped memory for tpu_custom_call.1']
    #allocation14 [shape = 'u8[32768]{0}', space=vmem, size = 0x8000, scoped, tag = 'input window, operand 6, single buffered']
    #allocation15 [shape = 'u8[8192]{0}', space=vmem, size = 0x2000, scoped, tag = 'input window, operand 7, single buffered']
    #allocation16 [shape = 's32[1]{0}', space=sflag, size = 0x4, scoped, tag = 'scoped memory for tpu_custom_call.1']
    #allocation17 [shape = 'u8[16384]{0}', space=vmem, size = 0x4000, scoped, tag = 'input window, operand 8, single buffered']
    #allocation18 [shape = 'u8[16384]{0}', space=vmem, size = 0x4000, scoped, tag = 'input window, operand 9, single buffered']
    #allocation19 [shape = 's32[1]{0}', space=sflag, size = 0x4, scoped, tag = 'scoped memory for tpu_custom_call.1']
    #allocation20 [shape = 'u8[512]{0}', space=vmem, size = 0x400, scoped, tag = 'output window, operand 0, single buffered']
    %18 = vsyncpa [#allocation4], 0
    %19 = vsyncpa [#allocation7], 0
    %20 = vsyncpa [#allocation10], 0
    %21 = vsyncpa [#allocation13], 0
    %22 = vsyncpa [#allocation16], 0
    %23 = vsyncpa [#allocation19], 0
    %24 = vsyncpa [#allocation5], 0
    // Predicated region
    $region2: #{tpu_custom_call.1} parent=1 // pred_check
      _
    $region3: #{tpu_custom_call.1} parent=1 // pred_check_branch
      %26 = sbr.rel (0) target = $region5
    $region4: #{tpu_custom_call.1} parent=1 // pred_region
      %s28 = ssub.s32 128, 128
      %29 = vsyncadd [#allocation4], %s28
      %s30 = sshll.u32 [#allocation3], 4
      %s31 = int_to_ptr.vmem [resolvable:$true] %s30
      %36 = dma.hbm_to_vmem [thread:$0]  %s0, 128, %s31, [#allocation4], 64, 64, 4
    $region5: #{tpu_custom_call.1} parent=1 // pred_fallthru
      _
    // Predicated region
    $region6: #{tpu_custom_call.1} parent=1 // pred_check
      _
    $region7: #{tpu_custom_call.1} parent=1 // pred_check_branch
      %38 = sbr.rel (0) target = $region9
    $region8: #{tpu_custom_call.1} parent=1 // pred_region
      %s40 = ssub.s32 1024, 1024
      %41 = vsyncadd [#allocation7], %s40
      %s42 = sshll.u32 [#allocation6], 4
      %s43 = int_to_ptr.vmem [resolvable:$true] %s42
      %48 = dma.hbm_to_vmem [thread:$0]  %s1, 1024, %s43, [#allocation7], 64, 64, 4
    $region9: #{tpu_custom_call.1} parent=1 // pred_fallthru
      _
    // Predicated region
    $region10: #{tpu_custom_call.1} parent=1 // pred_check
      _
    $region11: #{tpu_custom_call.1} parent=1 // pred_check_branch
      %50 = sbr.rel (0) target = $region13
    $region12: #{tpu_custom_call.1} parent=1 // pred_region
      %s52 = ssub.s32 2048, 2048
      %53 = vsyncadd [#allocation7], %s52
      %s54 = sshll.u32 [#allocation8], 4
      %s55 = int_to_ptr.vmem [resolvable:$true] %s54
      %60 = dma.hbm_to_vmem [thread:$0]  %s2, 2048, %s55, [#allocation7], 128, 128, 8
    $region13: #{tpu_custom_call.1} parent=1 // pred_fallthru
      _
    // Predicated region
    $region14: #{tpu_custom_call.1} parent=1 // pred_check
      _
    $region15: #{tpu_custom_call.1} parent=1 // pred_check_branch
      %62 = sbr.rel (0) target = $region17
    $region16: #{tpu_custom_call.1} parent=1 // pred_region
      %s64 = ssub.s32 1024, 1024
      %65 = vsyncadd [#allocation10], %s64
      %s66 = sshll.u32 [#allocation9], 4
      %s67 = int_to_ptr.vmem [resolvable:$true] %s66
      %72 = dma.hbm_to_vmem [thread:$0]  %s3, 1024, %s67, [#allocation10], 64, 64, 4
    $region17: #{tpu_custom_call.1} parent=1 // pred_fallthru
      _
    // Predicated region
    $region18: #{tpu_custom_call.1} parent=1 // pred_check
      _
    $region19: #{tpu_custom_call.1} parent=1 // pred_check_branch
      %74 = sbr.rel (0) target = $region21
    $region20: #{tpu_custom_call.1} parent=1 // pred_region
      %s76 = ssub.s32 2048, 2048
      %77 = vsyncadd [#allocation10], %s76
      %s78 = sshll.u32 [#allocation11], 4
      %s79 = int_to_ptr.vmem [resolvable:$true] %s78
      %84 = dma.hbm_to_vmem [thread:$0]  %s4, 2048, %s79, [#allocation10], 128, 128, 8
    $region21: #{tpu_custom_call.1} parent=1 // pred_fallthru
      _
    // Predicated region
    $region22: #{tpu_custom_call.1} parent=1 // pred_check
      _
    $region23: #{tpu_custom_call.1} parent=1 // pred_check_branch
      %86 = sbr.rel (0) target = $region25
    $region24: #{tpu_custom_call.1} parent=1 // pred_region
      %s88 = ssub.s32 512, 512
      %89 = vsyncadd [#allocation13], %s88
      %s90 = sshll.u32 [#allocation12], 4
      %s91 = int_to_ptr.vmem [resolvable:$true] %s90
      %96 = dma.hbm_to_vmem [thread:$0]  %s5, 512, %s91, [#allocation13], 64, 64, 4
    $region25: #{tpu_custom_call.1} parent=1 // pred_fallthru
      _
    // Predicated region
    $region26: #{tpu_custom_call.1} parent=1 // pred_check
      _
    $region27: #{tpu_custom_call.1} parent=1 // pred_check_branch
      %98 = sbr.rel (0) target = $region29
    $region28: #{tpu_custom_call.1} parent=1 // pred_region
      %s100 = ssub.s32 1024, 1024
      %101 = vsyncadd [#allocation13], %s100
      %s102 = sshll.u32 [#allocation14], 4
      %s103 = int_to_ptr.vmem [resolvable:$true] %s102
      %108 = dma.hbm_to_vmem [thread:$0]  %s6, 1024, %s103, [#allocation13], 128, 128, 8
    $region29: #{tpu_custom_call.1} parent=1 // pred_fallthru
      _
    // Predicated region
    $region30: #{tpu_custom_call.1} parent=1 // pred_check
      _
    $region31: #{tpu_custom_call.1} parent=1 // pred_check_branch
      %110 = sbr.rel (0) target = $region33
    $region32: #{tpu_custom_call.1} parent=1 // pred_region
      %s112 = ssub.s32 256, 256
      %113 = vsyncadd [#allocation16], %s112
      %s114 = sshll.u32 [#allocation15], 4
      %s115 = int_to_ptr.vmem [resolvable:$true] %s114
      %120 = dma.hbm_to_vmem [thread:$0]  %s7, 256, %s115, [#allocation16], 64, 64, 4
    $region33: #{tpu_custom_call.1} parent=1 // pred_fallthru
      _
    // Predicated region
    $region34: #{tpu_custom_call.1} parent=1 // pred_check
      _
    $region35: #{tpu_custom_call.1} parent=1 // pred_check_branch
      %122 = sbr.rel (0) target = $region37
    $region36: #{tpu_custom_call.1} parent=1 // pred_region
      %s124 = ssub.s32 512, 512
      %125 = vsyncadd [#allocation16], %s124
      %s126 = sshll.u32 [#allocation17], 4
      %s127 = int_to_ptr.vmem [resolvable:$true] %s126
      %132 = dma.hbm_to_vmem [thread:$0]  %s8, 512, %s127, [#allocation16], 128, 128, 8
    $region37: #{tpu_custom_call.1} parent=1 // pred_fallthru
      _
    // Predicated region
    $region38: #{tpu_custom_call.1} parent=1 // pred_check
      _
    $region39: #{tpu_custom_call.1} parent=1 // pred_check_branch
      %134 = sbr.rel (0) target = $region41
    $region40: #{tpu_custom_call.1} parent=1 // pred_region
      %s136 = ssub.s32 512, 512
      %137 = vsyncadd [#allocation19], %s136
      %s138 = sshll.u32 [#allocation18], 4
      %s139 = int_to_ptr.vmem [resolvable:$true] %s138
      %144 = dma.hbm_to_vmem [thread:$0]  %s9, 512, %s139, [#allocation19], 128, 128, 8
    $region41: #{tpu_custom_call.1} parent=1 // pred_fallthru
      _
    // Predicated region
    $region42: #{tpu_custom_call.1} parent=1 // pred_check
      _
    $region43: #{tpu_custom_call.1} parent=1 // pred_check_branch
      %146 = sbr.rel (0) target = $region45
    $region44: #{tpu_custom_call.1} parent=1 // pred_region
      _
    $region45: #{tpu_custom_call.1} parent=1 // pred_fallthru
      _
    // Predicated region
    $region46: #{tpu_custom_call.1} parent=1 // pred_check
      _
    $region47: #{tpu_custom_call.1} parent=1 // pred_check_branch
      %148 = sbr.rel (0) target = $region49
    $region48: #{tpu_custom_call.1} parent=1 // pred_region
      %149 = dma.done [#allocation4], 128
    $region49: #{tpu_custom_call.1} parent=1 // pred_fallthru
      _
    // Predicated region
    $region50: #{tpu_custom_call.1} parent=1 // pred_check
      _
    $region51: #{tpu_custom_call.1} parent=1 // pred_check_branch
      %151 = sbr.rel (0) target = $region53
    $region52: #{tpu_custom_call.1} parent=1 // pred_region
      %152 = dma.done [#allocation7], 1024
    $region53: #{tpu_custom_call.1} parent=1 // pred_fallthru
      _
    // Predicated region
    $region54: #{tpu_custom_call.1} parent=1 // pred_check
      _
    $region55: #{tpu_custom_call.1} parent=1 // pred_check_branch
      %154 = sbr.rel (0) target = $region57
    $region56: #{tpu_custom_call.1} parent=1 // pred_region
      %155 = dma.done [#allocation7], 2048
    $region57: #{tpu_custom_call.1} parent=1 // pred_fallthru
      _
    // Predicated region
    $region58: #{tpu_custom_call.1} parent=1 // pred_check
      _
    $region59: #{tpu_custom_call.1} parent=1 // pred_check_branch
      %157 = sbr.rel (0) target = $region61
    $region60: #{tpu_custom_call.1} parent=1 // pred_region
      %158 = dma.done [#allocation10], 1024
    $region61: #{tpu_custom_call.1} parent=1 // pred_fallthru
      _
    // Predicated region
    $region62: #{tpu_custom_call.1} parent=1 // pred_check
      _
    $region63: #{tpu_custom_call.1} parent=1 // pred_check_branch
      %160 = sbr.rel (0) target = $region65
    $region64: #{tpu_custom_call.1} parent=1 // pred_region
      %161 = dma.done [#allocation10], 2048
    $region65: #{tpu_custom_call.1} parent=1 // pred_fallthru
      _
    // Predicated region
    $region66: #{tpu_custom_call.1} parent=1 // pred_check
      _
    $region67: #{tpu_custom_call.1} parent=1 // pred_check_branch
      %163 = sbr.rel (0) target = $region69
    $region68: #{tpu_custom_call.1} parent=1 // pred_region
      %164 = dma.done [#allocation13], 512
    $region69: #{tpu_custom_call.1} parent=1 // pred_fallthru
      _
    // Predicated region
    $region70: #{tpu_custom_call.1} parent=1 // pred_check
      _
    $region71: #{tpu_custom_call.1} parent=1 // pred_check_branch
      %166 = sbr.rel (0) target = $region73
    $region72: #{tpu_custom_call.1} parent=1 // pred_region
      %167 = dma.done [#allocation13], 1024
    $region73: #{tpu_custom_call.1} parent=1 // pred_fallthru
      _
    // Predicated region
    $region74: #{tpu_custom_call.1} parent=1 // pred_check
      _
    $region75: #{tpu_custom_call.1} parent=1 // pred_check_branch
      %169 = sbr.rel (0) target = $region77
    $region76: #{tpu_custom_call.1} parent=1 // pred_region
      %170 = dma.done [#allocation16], 256
    $region77: #{tpu_custom_call.1} parent=1 // pred_fallthru
      _
    // Predicated region
    $region78: #{tpu_custom_call.1} parent=1 // pred_check
      _
    $region79: #{tpu_custom_call.1} parent=1 // pred_check_branch
      %172 = sbr.rel (0) target = $region81
    $region80: #{tpu_custom_call.1} parent=1 // pred_region
      %173 = dma.done [#allocation16], 512
    $region81: #{tpu_custom_call.1} parent=1 // pred_fallthru
      _
    // Predicated region
    $region82: #{tpu_custom_call.1} parent=1 // pred_check
      _
    $region83: #{tpu_custom_call.1} parent=1 // pred_check_branch
      %175 = sbr.rel (0) target = $region85
    $region84: #{tpu_custom_call.1} parent=1 // pred_region
      %176 = dma.done [#allocation19], 512
    $region85: #{tpu_custom_call.1} parent=1 // pred_fallthru
      _
    %v178 = vld [vmem:[#allocation3] sm:$0xf]
    %v179 = vld [vmem:[#allocation3 + $0x4] sm:$0xf]
    %v180 = vld [vmem:[#allocation6] sm:$0xf]
    %v181 = vld [vmem:[#allocation6 + $0x4] sm:$0xf]
    %v182 = vld [vmem:[#allocation6 + $0x8] sm:$0xf]
    %v183 = vld [vmem:[#allocation6 + $0xc] sm:$0xf]
    %v184 = vld [vmem:[#allocation6 + $0x10] sm:$0xf]
    %v185 = vld [vmem:[#allocation6 + $0x14] sm:$0xf]
    %v186 = vld [vmem:[#allocation6 + $0x18] sm:$0xf]
    %v187 = vld [vmem:[#allocation6 + $0x1c] sm:$0xf]
    %v188 = vld [vmem:[#allocation6 + $0x20] sm:$0xf]
    %v189 = vld [vmem:[#allocation6 + $0x24] sm:$0xf]
    %v190 = vld [vmem:[#allocation6 + $0x28] sm:$0xf]
    %v191 = vld [vmem:[#allocation6 + $0x2c] sm:$0xf]
    %v192 = vld [vmem:[#allocation6 + $0x30] sm:$0xf]
    %v193 = vld [vmem:[#allocation6 + $0x34] sm:$0xf]
    %v194 = vld [vmem:[#allocation6 + $0x38] sm:$0xf]
    %v195 = vld [vmem:[#allocation6 + $0x3c] sm:$0xf]
    %v196 = vld [vmem:[#allocation8] sm:$0xff]
    %v197 = vld [vmem:[#allocation8 + $0x8] sm:$0xff]
    %v198 = vld [vmem:[#allocation8 + $0x10] sm:$0xff]
    %v199 = vld [vmem:[#allocation8 + $0x18] sm:$0xff]
    %v200 = vld [vmem:[#allocation8 + $0x20] sm:$0xff]
    %v201 = vld [vmem:[#allocation8 + $0x28] sm:$0xff]
    %v202 = vld [vmem:[#allocation8 + $0x30] sm:$0xff]
    %v203 = vld [vmem:[#allocation8 + $0x38] sm:$0xff]
    %v204 = vld [vmem:[#allocation8 + $0x40] sm:$0xff]
    %v205 = vld [vmem:[#allocation8 + $0x48] sm:$0xff]
    %v206 = vld [vmem:[#allocation8 + $0x50] sm:$0xff]
    %v207 = vld [vmem:[#allocation8 + $0x58] sm:$0xff]
    %v208 = vld [vmem:[#allocation8 + $0x60] sm:$0xff]
    %v209 = vld [vmem:[#allocation8 + $0x68] sm:$0xff]
    %v210 = vld [vmem:[#allocation8 + $0x70] sm:$0xff]
    %v211 = vld [vmem:[#allocation8 + $0x78] sm:$0xff]
    %213 = vset.pattern.permute.xlu0 0
    %214 = vperm.xlu0 %213, %v196
    %v215 = vpop.permute.xlu0 %214
    %218 = vset.pattern.permute.xlu0 0
    %219 = vperm.xlu0 %218, %v197
    %v220 = vpop.permute.xlu0 %219
    %223 = vset.pattern.permute.xlu0 0
    %224 = vperm.xlu0 %223, %v198
    %v225 = vpop.permute.xlu0 %224
    %228 = vset.pattern.permute.xlu0 0
    %229 = vperm.xlu0 %228, %v199
    %v230 = vpop.permute.xlu0 %229
    %233 = vset.pattern.permute.xlu0 0
    %234 = vperm.xlu0 %233, %v200
    %v235 = vpop.permute.xlu0 %234
    %238 = vset.pattern.permute.xlu0 0
    %239 = vperm.xlu0 %238, %v201
    %v240 = vpop.permute.xlu0 %239
    %243 = vset.pattern.permute.xlu0 0
    %244 = vperm.xlu0 %243, %v202
    %v245 = vpop.permute.xlu0 %244
    %248 = vset.pattern.permute.xlu0 0
    %249 = vperm.xlu0 %248, %v203
    %v250 = vpop.permute.xlu0 %249
    %253 = vset.pattern.permute.xlu0 0
    %254 = vperm.xlu0 %253, %v204
    %v255 = vpop.permute.xlu0 %254
    %258 = vset.pattern.permute.xlu0 0
    %259 = vperm.xlu0 %258, %v205
    %v260 = vpop.permute.xlu0 %259
    %263 = vset.pattern.permute.xlu0 0
    %264 = vperm.xlu0 %263, %v206
    %v265 = vpop.permute.xlu0 %264
    %268 = vset.pattern.permute.xlu0 0
    %269 = vperm.xlu0 %268, %v207
    %v270 = vpop.permute.xlu0 %269
    %273 = vset.pattern.permute.xlu0 0
    %274 = vperm.xlu0 %273, %v208
    %v275 = vpop.permute.xlu0 %274
    %278 = vset.pattern.permute.xlu0 0
    %279 = vperm.xlu0 %278, %v209
    %v280 = vpop.permute.xlu0 %279
    %283 = vset.pattern.permute.xlu0 0
    %284 = vperm.xlu0 %283, %v210
    %v285 = vpop.permute.xlu0 %284
    %288 = vset.pattern.permute.xlu0 0
    %289 = vperm.xlu0 %288, %v211
    %v290 = vpop.permute.xlu0 %289
    %v308 = vunpack.c.l.b16 %v180
    %v309 = vunpack.c.l.b16 %v181
    %v310 = vunpack.c.l.b16 %v182
    %v311 = vunpack.c.l.b16 %v183
    %v312 = vunpack.c.l.b16 %v184
    %v313 = vunpack.c.l.b16 %v185
    %v314 = vunpack.c.l.b16 %v186
    %v315 = vunpack.c.l.b16 %v187
    %v316 = vunpack.c.l.b16 %v188
    %v317 = vunpack.c.l.b16 %v189
    %v318 = vunpack.c.l.b16 %v190
    %v319 = vunpack.c.l.b16 %v191
    %v320 = vunpack.c.l.b16 %v192
    %v321 = vunpack.c.l.b16 %v193
    %v322 = vunpack.c.l.b16 %v194
    %v323 = vunpack.c.l.b16 %v195
    %v324 = vpack.c.b16 %v309, %v308
    %v325 = vpack.c.b16 %v311, %v310
    %v326 = vpack.c.b16 %v313, %v312
    %v327 = vpack.c.b16 %v315, %v314
    %v328 = vpack.c.b16 %v317, %v316
    %v329 = vpack.c.b16 %v319, %v318
    %v330 = vpack.c.b16 %v321, %v320
    %v331 = vpack.c.b16 %v323, %v322
    %v334 = vunpack.c.l.b16 %v178
    %v335 = vunpack.c.l.b16 %v179
    %v336 = vpack.c.b16 %v335, %v334
    %vm338 = vcmask 130048
    %v340 = vsel %vm338, %v324, 0
    %v343 = vsel %vm338, %v325, 0
    %v346 = vsel %vm338, %v326, 0
    %v349 = vsel %vm338, %v327, 0
    %v352 = vsel %vm338, %v328, 0
    %v355 = vsel %vm338, %v329, 0
    %v358 = vsel %vm338, %v330, 0
    %v361 = vsel %vm338, %v331, 0
    %363 = vmatprep.subr.bf16.mxu0 0
    %364 = vmatpush1.bf16.msra.mxu0 %v336
    %365 = vmatprep.subr.bf16.mxu0 0
    %366 = vmatpush1.bf16.msra.mxu0 0
    %367 = vmatprep.subr.bf16.mxu0 0
    %368 = vmatpush1.bf16.msra.mxu0 0
    %369 = vmatprep.subr.bf16.mxu0 0
    %370 = vmatpush1.bf16.msra.mxu0 0
    %371 = vmatprep.subr.bf16.mxu0 0
    %372 = vmatpush1.bf16.msra.mxu0 0
    %373 = vmatprep.subr.bf16.mxu0 0
    %374 = vmatpush1.bf16.msra.mxu0 0
    %375 = vmatprep.subr.bf16.mxu0 0
    %376 = vmatpush1.bf16.msra.mxu0 0
    %377 = vmatprep.subr.bf16.mxu0 0
    %378 = vmatpush1.bf16.msra.mxu0 0
    %379 = vmatprep.subr.bf16.mxu0 0
    %380 = vmatpush1.bf16.msra.mxu0 0
    %381 = vmatprep.subr.bf16.mxu0 0
    %382 = vmatpush1.bf16.msra.mxu0 0
    %383 = vmatprep.subr.bf16.mxu0 0
    %384 = vmatpush1.bf16.msra.mxu0 0
    %385 = vmatprep.subr.bf16.mxu0 0
    %386 = vmatpush1.bf16.msra.mxu0 0
    %387 = vmatprep.subr.bf16.mxu0 0
    %388 = vmatpush1.bf16.msra.mxu0 0
    %389 = vmatprep.subr.bf16.mxu0 0
    %390 = vmatpush1.bf16.msra.mxu0 0
    %391 = vmatprep.subr.bf16.mxu0 0
    %392 = vmatpush1.bf16.msra.mxu0 0
    %393 = vmatprep.subr.bf16.mxu0 0
    %394 = vmatpush1.bf16.msra.mxu0 0
    %395 = vmatprep.mubr.bf16.mxu0 0
    %396 = vmatmul.mubr.bf16.gmra.mrb[0].mxu0 %v340
    %v397 = vpop.f32.mrb[0].mxu0
    %v398 = vadd.f32 %v215, %v397
    %v399 = vpop.f32.mrb[0].mxu0
    %v400 = vpop.f32.mrb[0].mxu0
    %v401 = vadd.f32 %v220, %v400
    %v402 = vpop.f32.mrb[0].mxu0
    %403 = vmatprep.mubr.bf16.mxu0 0
    %404 = vmatmul.mubr.bf16.gmra.mrb[0].mxu0 %v343
    %v405 = vpop.f32.mrb[0].mxu0
    %v406 = vadd.f32 %v225, %v405
    %v407 = vpop.f32.mrb[0].mxu0
    %v408 = vpop.f32.mrb[0].mxu0
    %v409 = vadd.f32 %v230, %v408
    %v410 = vpop.f32.mrb[0].mxu0
    %411 = vmatprep.mubr.bf16.mxu0 0
    %412 = vmatmul.mubr.bf16.gmra.mrb[0].mxu0 %v346
    %v413 = vpop.f32.mrb[0].mxu0
    %v414 = vadd.f32 %v235, %v413
    %v415 = vpop.f32.mrb[0].mxu0
    %v416 = vpop.f32.mrb[0].mxu0
    %v417 = vadd.f32 %v240, %v416
    %v418 = vpop.f32.mrb[0].mxu0
    %419 = vmatprep.mubr.bf16.mxu0 0
    %420 = vmatmul.mubr.bf16.gmra.mrb[0].mxu0 %v349
    %v421 = vpop.f32.mrb[0].mxu0
    %v422 = vadd.f32 %v245, %v421
    %v423 = vpop.f32.mrb[0].mxu0
    %v424 = vpop.f32.mrb[0].mxu0
    %v425 = vadd.f32 %v250, %v424
    %v426 = vpop.f32.mrb[0].mxu0
    %427 = vmatprep.mubr.bf16.mxu0 0
    %428 = vmatmul.mubr.bf16.gmra.mrb[0].mxu0 %v352
    %v429 = vpop.f32.mrb[0].mxu0
    %v430 = vadd.f32 %v255, %v429
    %v431 = vpop.f32.mrb[0].mxu0
    %v432 = vpop.f32.mrb[0].mxu0
    %v433 = vadd.f32 %v260, %v432
    %v434 = vpop.f32.mrb[0].mxu0
    %435 = vmatprep.mubr.bf16.mxu0 0
    %436 = vmatmul.mubr.bf16.gmra.mrb[0].mxu0 %v355
    %v437 = vpop.f32.mrb[0].mxu0
    %v438 = vadd.f32 %v265, %v437
    %v439 = vpop.f32.mrb[0].mxu0
    %v440 = vpop.f32.mrb[0].mxu0
    %v441 = vadd.f32 %v270, %v440
    %v442 = vpop.f32.mrb[0].mxu0
    %443 = vmatprep.mubr.bf16.mxu0 0
    %444 = vmatmul.mubr.bf16.gmra.mrb[0].mxu0 %v358
    %v445 = vpop.f32.mrb[0].mxu0
    %v446 = vadd.f32 %v275, %v445
    %v447 = vpop.f32.mrb[0].mxu0
    %v448 = vpop.f32.mrb[0].mxu0
    %v449 = vadd.f32 %v280, %v448
    %v450 = vpop.f32.mrb[0].mxu0
    %451 = vmatprep.mubr.bf16.mxu0 0
    %452 = vmatmul.mubr.bf16.gmra.mrb[0].mxu0 %v361
    %v453 = vpop.f32.mrb[0].mxu0
    %v454 = vadd.f32 %v285, %v453
    %v455 = vpop.f32.mrb[0].mxu0
    %v456 = vpop.f32.mrb[0].mxu0
    %v457 = vadd.f32 %v290, %v456
    %v458 = vpop.f32.mrb[0].mxu0
    %459 = vdwg.mxu0
    %v460 = vmax.f32 %v398, 0.0
    %v461 = vmax.f32 %v401, 0.0
    %v462 = vmax.f32 %v406, 0.0
    %v463 = vmax.f32 %v409, 0.0
    %v464 = vmax.f32 %v414, 0.0
    %v465 = vmax.f32 %v417, 0.0
    %v466 = vmax.f32 %v422, 0.0
    %v467 = vmax.f32 %v425, 0.0
    %v468 = vmax.f32 %v430, 0.0
    %v469 = vmax.f32 %v433, 0.0
    %v470 = vmax.f32 %v438, 0.0
    %v471 = vmax.f32 %v441, 0.0
    %v472 = vmax.f32 %v446, 0.0
    %v473 = vmax.f32 %v449, 0.0
    %v474 = vmax.f32 %v454, 0.0
    %v475 = vmax.f32 %v457, 0.0
    %v476 = vld [vmem:[#allocation9] sm:$0xf]
    %v477 = vld [vmem:[#allocation9 + $0x4] sm:$0xf]
    %v478 = vld [vmem:[#allocation9 + $0x8] sm:$0xf]
    %v479 = vld [vmem:[#allocation9 + $0xc] sm:$0xf]
    %v480 = vld [vmem:[#allocation9 + $0x10] sm:$0xf]
    %v481 = vld [vmem:[#allocation9 + $0x14] sm:$0xf]
    %v482 = vld [vmem:[#allocation9 + $0x18] sm:$0xf]
    %v483 = vld [vmem:[#allocation9 + $0x1c] sm:$0xf]
    %v484 = vld [vmem:[#allocation9 + $0x20] sm:$0xf]
    %v485 = vld [vmem:[#allocation9 + $0x24] sm:$0xf]
    %v486 = vld [vmem:[#allocation9 + $0x28] sm:$0xf]
    %v487 = vld [vmem:[#allocation9 + $0x2c] sm:$0xf]
    %v488 = vld [vmem:[#allocation9 + $0x30] sm:$0xf]
    %v489 = vld [vmem:[#allocation9 + $0x34] sm:$0xf]
    %v490 = vld [vmem:[#allocation9 + $0x38] sm:$0xf]
    %v491 = vld [vmem:[#allocation9 + $0x3c] sm:$0xf]
    %v492 = vpack.c.bf16 %v461, %v460
    %v493 = vpack.c.bf16 %v463, %v462
    %v494 = vpack.c.bf16 %v465, %v464
    %v495 = vpack.c.bf16 %v467, %v466
    %v496 = vpack.c.bf16 %v469, %v468
    %v497 = vpack.c.bf16 %v471, %v470
    %v498 = vpack.c.bf16 %v473, %v472
    %v499 = vpack.c.bf16 %v475, %v474
    %v500 = vld [vmem:[#allocation11] sm:$0xff]
    %v501 = vld [vmem:[#allocation11 + $0x8] sm:$0xff]
    %v502 = vld [vmem:[#allocation11 + $0x10] sm:$0xff]
    %v503 = vld [vmem:[#allocation11 + $0x18] sm:$0xff]
    %v504 = vld [vmem:[#allocation11 + $0x20] sm:$0xff]
    %v505 = vld [vmem:[#allocation11 + $0x28] sm:$0xff]
    %v506 = vld [vmem:[#allocation11 + $0x30] sm:$0xff]
    %v507 = vld [vmem:[#allocation11 + $0x38] sm:$0xff]
    %v508 = vld [vmem:[#allocation11 + $0x40] sm:$0xff]
    %v509 = vld [vmem:[#allocation11 + $0x48] sm:$0xff]
    %v510 = vld [vmem:[#allocation11 + $0x50] sm:$0xff]
    %v511 = vld [vmem:[#allocation11 + $0x58] sm:$0xff]
    %v512 = vld [vmem:[#allocation11 + $0x60] sm:$0xff]
    %v513 = vld [vmem:[#allocation11 + $0x68] sm:$0xff]
    %v514 = vld [vmem:[#allocation11 + $0x70] sm:$0xff]
    %v515 = vld [vmem:[#allocation11 + $0x78] sm:$0xff]
    %517 = vset.pattern.permute.xlu0 0
    %518 = vperm.xlu0 %517, %v500
    %v519 = vpop.permute.xlu0 %518
    %522 = vset.pattern.permute.xlu0 0
    %523 = vperm.xlu0 %522, %v501
    %v524 = vpop.permute.xlu0 %523
    %527 = vset.pattern.permute.xlu0 0
    %528 = vperm.xlu0 %527, %v502
    %v529 = vpop.permute.xlu0 %528
    %532 = vset.pattern.permute.xlu0 0
    %533 = vperm.xlu0 %532, %v503
    %v534 = vpop.permute.xlu0 %533
    %537 = vset.pattern.permute.xlu0 0
    %538 = vperm.xlu0 %537, %v504
    %v539 = vpop.permute.xlu0 %538
    %542 = vset.pattern.permute.xlu0 0
    %543 = vperm.xlu0 %542, %v505
    %v544 = vpop.permute.xlu0 %543
    %547 = vset.pattern.permute.xlu0 0
    %548 = vperm.xlu0 %547, %v506
    %v549 = vpop.permute.xlu0 %548
    %552 = vset.pattern.permute.xlu0 0
    %553 = vperm.xlu0 %552, %v507
    %v554 = vpop.permute.xlu0 %553
    %557 = vset.pattern.permute.xlu0 0
    %558 = vperm.xlu0 %557, %v508
    %v559 = vpop.permute.xlu0 %558
    %562 = vset.pattern.permute.xlu0 0
    %563 = vperm.xlu0 %562, %v509
    %v564 = vpop.permute.xlu0 %563
    %567 = vset.pattern.permute.xlu0 0
    %568 = vperm.xlu0 %567, %v510
    %v569 = vpop.permute.xlu0 %568
    %572 = vset.pattern.permute.xlu0 0
    %573 = vperm.xlu0 %572, %v511
    %v574 = vpop.permute.xlu0 %573
    %577 = vset.pattern.permute.xlu0 0
    %578 = vperm.xlu0 %577, %v512
    %v579 = vpop.permute.xlu0 %578
    %582 = vset.pattern.permute.xlu0 0
    %583 = vperm.xlu0 %582, %v513
    %v584 = vpop.permute.xlu0 %583
    %587 = vset.pattern.permute.xlu0 0
    %588 = vperm.xlu0 %587, %v514
    %v589 = vpop.permute.xlu0 %588
    %592 = vset.pattern.permute.xlu0 0
    %593 = vperm.xlu0 %592, %v515
    %v594 = vpop.permute.xlu0 %593
    %v612 = vunpack.c.l.b16 %v476
    %v613 = vunpack.c.l.b16 %v477
    %v614 = vunpack.c.l.b16 %v478
    %v615 = vunpack.c.l.b16 %v479
    %v616 = vunpack.c.l.b16 %v480
    %v617 = vunpack.c.l.b16 %v481
    %v618 = vunpack.c.l.b16 %v482
    %v619 = vunpack.c.l.b16 %v483
    %v620 = vunpack.c.l.b16 %v484
    %v621 = vunpack.c.l.b16 %v485
    %v622 = vunpack.c.l.b16 %v486
    %v623 = vunpack.c.l.b16 %v487
    %v624 = vunpack.c.l.b16 %v488
    %v625 = vunpack.c.l.b16 %v489
    %v626 = vunpack.c.l.b16 %v490
    %v627 = vunpack.c.l.b16 %v491
    %v628 = vpack.c.b16 %v613, %v612
    %v629 = vpack.c.b16 %v615, %v614
    %v630 = vpack.c.b16 %v617, %v616
    %v631 = vpack.c.b16 %v619, %v618
    %v632 = vpack.c.b16 %v621, %v620
    %v633 = vpack.c.b16 %v623, %v622
    %v634 = vpack.c.b16 %v625, %v624
    %v635 = vpack.c.b16 %v627, %v626
    %644 = vmatprep.subr.bf16.mxu0 0
    %645 = vmatpush1.bf16.msra.mxu0 %v492
    %646 = vmatprep.subr.bf16.mxu0 0
    %647 = vmatpush1.bf16.msra.mxu0 %v493
    %648 = vmatprep.subr.bf16.mxu0 0
    %649 = vmatpush1.bf16.msra.mxu0 %v494
    %650 = vmatprep.subr.bf16.mxu0 0
    %651 = vmatpush1.bf16.msra.mxu0 %v495
    %652 = vmatprep.subr.bf16.mxu0 0
    %653 = vmatpush1.bf16.msra.mxu0 %v496
    %654 = vmatprep.subr.bf16.mxu0 0
    %655 = vmatpush1.bf16.msra.mxu0 %v497
    %656 = vmatprep.subr.bf16.mxu0 0
    %657 = vmatpush1.bf16.msra.mxu0 %v498
    %658 = vmatprep.subr.bf16.mxu0 0
    %659 = vmatpush1.bf16.msra.mxu0 %v499
    %660 = vmatprep.subr.bf16.mxu0 0
    %661 = vmatpush1.bf16.msra.mxu0 0
    %662 = vmatprep.subr.bf16.mxu0 0
    %663 = vmatpush1.bf16.msra.mxu0 0
    %664 = vmatprep.subr.bf16.mxu0 0
    %665 = vmatpush1.bf16.msra.mxu0 0
    %666 = vmatprep.subr.bf16.mxu0 0
    %667 = vmatpush1.bf16.msra.mxu0 0
    %668 = vmatprep.subr.bf16.mxu0 0
    %669 = vmatpush1.bf16.msra.mxu0 0
    %670 = vmatprep.subr.bf16.mxu0 0
    %671 = vmatpush1.bf16.msra.mxu0 0
    %672 = vmatprep.subr.bf16.mxu0 0
    %673 = vmatpush1.bf16.msra.mxu0 0
    %674 = vmatprep.subr.bf16.mxu0 0
    %675 = vmatpush1.bf16.msra.mxu0 0
    %676 = vmatprep.mubr.bf16.mxu0 0
    %677 = vmatmul.mubr.bf16.gmra.mrb[0].mxu0 %v628
    %v678 = vpop.f32.mrb[0].mxu0
    %v679 = vadd.f32 %v519, %v678
    %v680 = vpop.f32.mrb[0].mxu0
    %v681 = vpop.f32.mrb[0].mxu0
    %v682 = vadd.f32 %v524, %v681
    %v683 = vpop.f32.mrb[0].mxu0
    %684 = vmatprep.mubr.bf16.mxu0 0
    %685 = vmatmul.mubr.bf16.gmra.mrb[0].mxu0 %v629
    %v686 = vpop.f32.mrb[0].mxu0
    %v687 = vadd.f32 %v529, %v686
    %v688 = vpop.f32.mrb[0].mxu0
    %v689 = vpop.f32.mrb[0].mxu0
    %v690 = vadd.f32 %v534, %v689
    %v691 = vpop.f32.mrb[0].mxu0
    %692 = vmatprep.mubr.bf16.mxu0 0
    %693 = vmatmul.mubr.bf16.gmra.mrb[0].mxu0 %v630
    %v694 = vpop.f32.mrb[0].mxu0
    %v695 = vadd.f32 %v539, %v694
    %v696 = vpop.f32.mrb[0].mxu0
    %v697 = vpop.f32.mrb[0].mxu0
    %v698 = vadd.f32 %v544, %v697
    %v699 = vpop.f32.mrb[0].mxu0
    %700 = vmatprep.mubr.bf16.mxu0 0
    %701 = vmatmul.mubr.bf16.gmra.mrb[0].mxu0 %v631
    %v702 = vpop.f32.mrb[0].mxu0
    %v703 = vadd.f32 %v549, %v702
    %v704 = vpop.f32.mrb[0].mxu0
    %v705 = vpop.f32.mrb[0].mxu0
    %v706 = vadd.f32 %v554, %v705
    %v707 = vpop.f32.mrb[0].mxu0
    %708 = vmatprep.mubr.bf16.mxu0 0
    %709 = vmatmul.mubr.bf16.gmra.mrb[0].mxu0 %v632
    %v710 = vpop.f32.mrb[0].mxu0
    %v711 = vadd.f32 %v559, %v710
    %v712 = vpop.f32.mrb[0].mxu0
    %v713 = vpop.f32.mrb[0].mxu0
    %v714 = vadd.f32 %v564, %v713
    %v715 = vpop.f32.mrb[0].mxu0
    %716 = vmatprep.mubr.bf16.mxu0 0
    %717 = vmatmul.mubr.bf16.gmra.mrb[0].mxu0 %v633
    %v718 = vpop.f32.mrb[0].mxu0
    %v719 = vadd.f32 %v569, %v718
    %v720 = vpop.f32.mrb[0].mxu0
    %v721 = vpop.f32.mrb[0].mxu0
    %v722 = vadd.f32 %v574, %v721
    %v723 = vpop.f32.mrb[0].mxu0
    %724 = vmatprep.mubr.bf16.mxu0 0
    %725 = vmatmul.mubr.bf16.gmra.mrb[0].mxu0 %v634
    %v726 = vpop.f32.mrb[0].mxu0
    %v727 = vadd.f32 %v579, %v726
    %v728 = vpop.f32.mrb[0].mxu0
    %v729 = vpop.f32.mrb[0].mxu0
    %v730 = vadd.f32 %v584, %v729
    %v731 = vpop.f32.mrb[0].mxu0
    %732 = vmatprep.mubr.bf16.mxu0 0
    %733 = vmatmul.mubr.bf16.gmra.mrb[0].mxu0 %v635
    %v734 = vpop.f32.mrb[0].mxu0
    %v735 = vadd.f32 %v589, %v734
    %v736 = vpop.f32.mrb[0].mxu0
    %v737 = vpop.f32.mrb[0].mxu0
    %v738 = vadd.f32 %v594, %v737
    %v739 = vpop.f32.mrb[0].mxu0
    %740 = vdwg.mxu0
    %v741 = vmax.f32 %v679, 0.0
    %v742 = vmax.f32 %v682, 0.0
    %v743 = vmax.f32 %v687, 0.0
    %v744 = vmax.f32 %v690, 0.0
    %v745 = vmax.f32 %v695, 0.0
    %v746 = vmax.f32 %v698, 0.0
    %v747 = vmax.f32 %v703, 0.0
    %v748 = vmax.f32 %v706, 0.0
    %v749 = vmax.f32 %v711, 0.0
    %v750 = vmax.f32 %v714, 0.0
    %v751 = vmax.f32 %v719, 0.0
    %v752 = vmax.f32 %v722, 0.0
    %v753 = vmax.f32 %v727, 0.0
    %v754 = vmax.f32 %v730, 0.0
    %v755 = vmax.f32 %v735, 0.0
    %v756 = vmax.f32 %v738, 0.0
    %v757 = vld [vmem:[#allocation12] sm:$0xf]
    %v758 = vld [vmem:[#allocation12 + $0x4] sm:$0xf]
    %v759 = vld [vmem:[#allocation12 + $0x8] sm:$0xf]
    %v760 = vld [vmem:[#allocation12 + $0xc] sm:$0xf]
    %v761 = vld [vmem:[#allocation12 + $0x10] sm:$0xf]
    %v762 = vld [vmem:[#allocation12 + $0x14] sm:$0xf]
    %v763 = vld [vmem:[#allocation12 + $0x18] sm:$0xf]
    %v764 = vld [vmem:[#allocation12 + $0x1c] sm:$0xf]
    %v765 = vpack.c.bf16 %v742, %v741
    %v766 = vpack.c.bf16 %v744, %v743
    %v767 = vpack.c.bf16 %v746, %v745
    %v768 = vpack.c.bf16 %v748, %v747
    %v769 = vpack.c.bf16 %v750, %v749
    %v770 = vpack.c.bf16 %v752, %v751
    %v771 = vpack.c.bf16 %v754, %v753
    %v772 = vpack.c.bf16 %v756, %v755
    %v773 = vld [vmem:[#allocation14] sm:$0xff]
    %v774 = vld [vmem:[#allocation14 + $0x8] sm:$0xff]
    %v775 = vld [vmem:[#allocation14 + $0x10] sm:$0xff]
    %v776 = vld [vmem:[#allocation14 + $0x18] sm:$0xff]
    %v777 = vld [vmem:[#allocation14 + $0x20] sm:$0xff]
    %v778 = vld [vmem:[#allocation14 + $0x28] sm:$0xff]
    %v779 = vld [vmem:[#allocation14 + $0x30] sm:$0xff]
    %v780 = vld [vmem:[#allocation14 + $0x38] sm:$0xff]
    %782 = vset.pattern.permute.xlu0 0
    %783 = vperm.xlu0 %782, %v773
    %v784 = vpop.permute.xlu0 %783
    %787 = vset.pattern.permute.xlu0 0
    %788 = vperm.xlu0 %787, %v774
    %v789 = vpop.permute.xlu0 %788
    %792 = vset.pattern.permute.xlu0 0
    %793 = vperm.xlu0 %792, %v775
    %v794 = vpop.permute.xlu0 %793
    %797 = vset.pattern.permute.xlu0 0
    %798 = vperm.xlu0 %797, %v776
    %v799 = vpop.permute.xlu0 %798
    %802 = vset.pattern.permute.xlu0 0
    %803 = vperm.xlu0 %802, %v777
    %v804 = vpop.permute.xlu0 %803
    %807 = vset.pattern.permute.xlu0 0
    %808 = vperm.xlu0 %807, %v778
    %v809 = vpop.permute.xlu0 %808
    %812 = vset.pattern.permute.xlu0 0
    %813 = vperm.xlu0 %812, %v779
    %v814 = vpop.permute.xlu0 %813
    %817 = vset.pattern.permute.xlu0 0
    %818 = vperm.xlu0 %817, %v780
    %v819 = vpop.permute.xlu0 %818
    %v829 = vunpack.c.l.b16 %v757
    %v830 = vunpack.c.l.b16 %v758
    %v831 = vunpack.c.l.b16 %v759
    %v832 = vunpack.c.l.b16 %v760
    %v833 = vunpack.c.l.b16 %v761
    %v834 = vunpack.c.l.b16 %v762
    %v835 = vunpack.c.l.b16 %v763
    %v836 = vunpack.c.l.b16 %v764
    %v837 = vpack.c.b16 %v830, %v829
    %v838 = vpack.c.b16 %v832, %v831
    %v839 = vpack.c.b16 %v834, %v833
    %v840 = vpack.c.b16 %v836, %v835
    %845 = vmatprep.subr.bf16.mxu0 0
    %846 = vmatpush1.bf16.msra.mxu0 %v765
    %847 = vmatprep.subr.bf16.mxu0 0
    %848 = vmatpush1.bf16.msra.mxu0 %v766
    %849 = vmatprep.subr.bf16.mxu0 0
    %850 = vmatpush1.bf16.msra.mxu0 %v767
    %851 = vmatprep.subr.bf16.mxu0 0
    %852 = vmatpush1.bf16.msra.mxu0 %v768
    %853 = vmatprep.subr.bf16.mxu0 0
    %854 = vmatpush1.bf16.msra.mxu0 %v769
    %855 = vmatprep.subr.bf16.mxu0 0
    %856 = vmatpush1.bf16.msra.mxu0 %v770
    %857 = vmatprep.subr.bf16.mxu0 0
    %858 = vmatpush1.bf16.msra.mxu0 %v771
    %859 = vmatprep.subr.bf16.mxu0 0
    %860 = vmatpush1.bf16.msra.mxu0 %v772
    %861 = vmatprep.subr.bf16.mxu0 0
    %862 = vmatpush1.bf16.msra.mxu0 0
    %863 = vmatprep.subr.bf16.mxu0 0
    %864 = vmatpush1.bf16.msra.mxu0 0
    %865 = vmatprep.subr.bf16.mxu0 0
    %866 = vmatpush1.bf16.msra.mxu0 0
    %867 = vmatprep.subr.bf16.mxu0 0
    %868 = vmatpush1.bf16.msra.mxu0 0
    %869 = vmatprep.subr.bf16.mxu0 0
    %870 = vmatpush1.bf16.msra.mxu0 0
    %871 = vmatprep.subr.bf16.mxu0 0
    %872 = vmatpush1.bf16.msra.mxu0 0
    %873 = vmatprep.subr.bf16.mxu0 0
    %874 = vmatpush1.bf16.msra.mxu0 0
    %875 = vmatprep.subr.bf16.mxu0 0
    %876 = vmatpush1.bf16.msra.mxu0 0
    %877 = vmatprep.mubr.bf16.mxu0 0
    %878 = vmatmul.mubr.bf16.gmra.mrb[0].mxu0 %v837
    %v879 = vpop.f32.mrb[0].mxu0
    %v880 = vadd.f32 %v784, %v879
    %v881 = vpop.f32.mrb[0].mxu0
    %v882 = vpop.f32.mrb[0].mxu0
    %v883 = vadd.f32 %v789, %v882
    %v884 = vpop.f32.mrb[0].mxu0
    %885 = vmatprep.mubr.bf16.mxu0 0
    %886 = vmatmul.mubr.bf16.gmra.mrb[0].mxu0 %v838
    %v887 = vpop.f32.mrb[0].mxu0
    %v888 = vadd.f32 %v794, %v887
    %v889 = vpop.f32.mrb[0].mxu0
    %v890 = vpop.f32.mrb[0].mxu0
    %v891 = vadd.f32 %v799, %v890
    %v892 = vpop.f32.mrb[0].mxu0
    %893 = vmatprep.mubr.bf16.mxu0 0
    %894 = vmatmul.mubr.bf16.gmra.mrb[0].mxu0 %v839
    %v895 = vpop.f32.mrb[0].mxu0
    %v896 = vadd.f32 %v804, %v895
    %v897 = vpop.f32.mrb[0].mxu0
    %v898 = vpop.f32.mrb[0].mxu0
    %v899 = vadd.f32 %v809, %v898
    %v900 = vpop.f32.mrb[0].mxu0
    %901 = vmatprep.mubr.bf16.mxu0 0
    %902 = vmatmul.mubr.bf16.gmra.mrb[0].mxu0 %v840
    %v903 = vpop.f32.mrb[0].mxu0
    %v904 = vadd.f32 %v814, %v903
    %v905 = vpop.f32.mrb[0].mxu0
    %v906 = vpop.f32.mrb[0].mxu0
    %v907 = vadd.f32 %v819, %v906
    %v908 = vpop.f32.mrb[0].mxu0
    %909 = vdwg.mxu0
    %v910 = vmax.f32 %v880, 0.0
    %v911 = vmax.f32 %v883, 0.0
    %v912 = vmax.f32 %v888, 0.0
    %v913 = vmax.f32 %v891, 0.0
    %v914 = vmax.f32 %v896, 0.0
    %v915 = vmax.f32 %v899, 0.0
    %v916 = vmax.f32 %v904, 0.0
    %v917 = vmax.f32 %v907, 0.0
    %v918 = vld [vmem:[#allocation15] sm:$0xf]
    %v919 = vld [vmem:[#allocation15 + $0x4] sm:$0xf]
    %v920 = vld [vmem:[#allocation15 + $0x8] sm:$0xf]
    %v921 = vld [vmem:[#allocation15 + $0xc] sm:$0xf]
    %v922 = vpack.c.bf16 %v911, %v910
    %v923 = vpack.c.bf16 %v913, %v912
    %v924 = vpack.c.bf16 %v915, %v914
    %v925 = vpack.c.bf16 %v917, %v916
    %v926 = vld [vmem:[#allocation17] sm:$0xff]
    %v927 = vld [vmem:[#allocation17 + $0x8] sm:$0xff]
    %v928 = vld [vmem:[#allocation17 + $0x10] sm:$0xff]
    %v929 = vld [vmem:[#allocation17 + $0x18] sm:$0xff]
    %931 = vset.pattern.permute.xlu0 0
    %932 = vperm.xlu0 %931, %v926
    %v933 = vpop.permute.xlu0 %932
    %936 = vset.pattern.permute.xlu0 0
    %937 = vperm.xlu0 %936, %v927
    %v938 = vpop.permute.xlu0 %937
    %941 = vset.pattern.permute.xlu0 0
    %942 = vperm.xlu0 %941, %v928
    %v943 = vpop.permute.xlu0 %942
    %946 = vset.pattern.permute.xlu0 0
    %947 = vperm.xlu0 %946, %v929
    %v948 = vpop.permute.xlu0 %947
    %v954 = vunpack.c.l.b16 %v918
    %v955 = vunpack.c.l.b16 %v919
    %v956 = vunpack.c.l.b16 %v920
    %v957 = vunpack.c.l.b16 %v921
    %v958 = vpack.c.b16 %v955, %v954
    %v959 = vpack.c.b16 %v957, %v956
    %vm960 = vcmask 523264
    %v962 = vsel %vm960, %v958, 0
    %v965 = vsel %vm960, %v959, 0
    %967 = vmatprep.subr.bf16.mxu0 0
    %968 = vmatpush1.bf16.msra.mxu0 %v922
    %969 = vmatprep.subr.bf16.mxu0 0
    %970 = vmatpush1.bf16.msra.mxu0 %v923
    %971 = vmatprep.subr.bf16.mxu0 0
    %972 = vmatpush1.bf16.msra.mxu0 %v924
    %973 = vmatprep.subr.bf16.mxu0 0
    %974 = vmatpush1.bf16.msra.mxu0 %v925
    %975 = vmatprep.subr.bf16.mxu0 0
    %976 = vmatpush1.bf16.msra.mxu0 0
    %977 = vmatprep.subr.bf16.mxu0 0
    %978 = vmatpush1.bf16.msra.mxu0 0
    %979 = vmatprep.subr.bf16.mxu0 0
    %980 = vmatpush1.bf16.msra.mxu0 0
    %981 = vmatprep.subr.bf16.mxu0 0
    %982 = vmatpush1.bf16.msra.mxu0 0
    %983 = vmatprep.subr.bf16.mxu0 0
    %984 = vmatpush1.bf16.msra.mxu0 0
    %985 = vmatprep.subr.bf16.mxu0 0
    %986 = vmatpush1.bf16.msra.mxu0 0
    %987 = vmatprep.subr.bf16.mxu0 0
    %988 = vmatpush1.bf16.msra.mxu0 0
    %989 = vmatprep.subr.bf16.mxu0 0
    %990 = vmatpush1.bf16.msra.mxu0 0
    %991 = vmatprep.subr.bf16.mxu0 0
    %992 = vmatpush1.bf16.msra.mxu0 0
    %993 = vmatprep.subr.bf16.mxu0 0
    %994 = vmatpush1.bf16.msra.mxu0 0
    %995 = vmatprep.subr.bf16.mxu0 0
    %996 = vmatpush1.bf16.msra.mxu0 0
    %997 = vmatprep.subr.bf16.mxu0 0
    %998 = vmatpush1.bf16.msra.mxu0 0
    %999 = vmatprep.mubr.bf16.mxu0 0
    %1000 = vmatmul.mubr.bf16.gmra.mrb[0].mxu0 %v962
    %v1001 = vpop.f32.mrb[0].mxu0
    %v1002 = vadd.f32 %v933, %v1001
    %v1003 = vpop.f32.mrb[0].mxu0
    %v1004 = vpop.f32.mrb[0].mxu0
    %v1005 = vadd.f32 %v938, %v1004
    %v1006 = vpop.f32.mrb[0].mxu0
    %1007 = vmatprep.mubr.bf16.mxu0 0
    %1008 = vmatmul.mubr.bf16.gmra.mrb[0].mxu0 %v965
    %v1009 = vpop.f32.mrb[0].mxu0
    %v1010 = vadd.f32 %v943, %v1009
    %v1011 = vpop.f32.mrb[0].mxu0
    %v1012 = vpop.f32.mrb[0].mxu0
    %v1013 = vadd.f32 %v948, %v1012
    %v1014 = vpop.f32.mrb[0].mxu0
    %1015 = vdwg.mxu0
    %v1016 = vmax.f32 %v1002, 0.0
    %v1017 = vmax.f32 %v1005, 0.0
    %v1018 = vmax.f32 %v1010, 0.0
    %v1019 = vmax.f32 %v1013, 0.0
    %v1020 = vld [vmem:[#allocation18] sm:$0xff]
    %v1021 = vld [vmem:[#allocation18 + $0x8] sm:$0xff]
    %v1022 = vld [vmem:[#allocation18 + $0x10] sm:$0xff]
    %v1023 = vld [vmem:[#allocation18 + $0x18] sm:$0xff]
    %1025 = vset.pattern.permute.xlu0 0
    %1026 = vperm.xlu0 %1025, %v1020
    %v1027 = vpop.permute.xlu0 %1026
    %1030 = vset.pattern.permute.xlu0 0
    %1031 = vperm.xlu0 %1030, %v1021
    %v1032 = vpop.permute.xlu0 %1031
    %1035 = vset.pattern.permute.xlu0 0
    %1036 = vperm.xlu0 %1035, %v1022
    %v1037 = vpop.permute.xlu0 %1036
    %1040 = vset.pattern.permute.xlu0 0
    %1041 = vperm.xlu0 %1040, %v1023
    %v1042 = vpop.permute.xlu0 %1041
    %v1044 = vmul.f32 %v1016, %v1027
    %v1045 = vmul.f32 %v1017, %v1032
    %v1046 = vmul.f32 %v1018, %v1037
    %v1047 = vmul.f32 %v1019, %v1042
    %v1048 = vadd.f32 %v1044, %v1045
    %v1049 = vadd.f32 %v1048, %v1046
    %v1050 = vadd.f32 %v1049, %v1047
    %v1051 = vrot.slane %v1050, 4
    %v1052 = vadd.f32 %v1050, %v1051
    %v1053 = vrot.slane %v1052, 2
    %v1054 = vadd.f32 %v1052, %v1053
    %v1055 = vrot.slane %v1054, 1
    %v1056 = vadd.f32 %v1054, %v1055
    %v1057 = vld [vmem:[#allocation2] sm:$0x1]
    %1059 = vset.pattern.permute.xlu0 0
    %1060 = vperm.xlu0 %1059, %v1057
    %v1061 = vpop.permute.xlu0 %1060
    %v1063 = vlaneseq
    %v1064 = vshrl.u32 %v1063, 7
    %v1065 = vsub.s32 0, %v1064
    %v1066 = vrot.slane %v1061, %v1065
    %v1067 = vadd.f32 %v1056, %v1066
    %v1068 = vxor.u32 %v1067, 2147483648
    %v1069 = vmul.f32 %v1068, 1.442695
    %v1070 = vpow.pop %v1069
    %v1071 = vadd.f32 %v1070, 1.0
    %v1072 = vrcp.pop %v1071
    %v1073 = vmul.f32 1.0, %v1072
    %1074 = vst [vmem:[#allocation20] sm:$0x1] %v1073
    // Predicated region
    $region86: #{tpu_custom_call.1} parent=1 // pred_check
      _
    $region87: #{tpu_custom_call.1} parent=1 // pred_check_branch
      %1076 = sbr.rel (0) target = $region89
    $region88: #{tpu_custom_call.1} parent=1 // pred_region
      %s1078 = ssub.s32 16, 16
      %1079 = vsyncadd [#allocation5], %s1078
      %s1081 = sshll.u32 [#allocation20], 4
      %s1082 = int_to_ptr.vmem [resolvable:$true] %s1081
      %1084 = dma.vmem_to_hbm [thread:$0]  %s1082, 16, %s11, [#allocation5]
    $region89: #{tpu_custom_call.1} parent=1 // pred_fallthru
      _
    // Predicated region
    $region90: #{tpu_custom_call.1} parent=1 // pred_check
      _
    $region91: #{tpu_custom_call.1} parent=1 // pred_check_branch
      %1086 = sbr.rel (0) target = $region93
    $region92: #{tpu_custom_call.1} parent=1 // pred_region
      %1087 = dma.done [#allocation5], 16
    $region93: #{tpu_custom_call.1} parent=1 // pred_fallthru
      _
    %1088 = vsyncpa [#allocation4], 1
    %1089 = vsyncpa [#allocation7], 1
    %1090 = vsyncpa [#allocation10], 1
    %1091 = vsyncpa [#allocation13], 1
    %1092 = vsyncpa [#allocation16], 1
    %1093 = vsyncpa [#allocation19], 1
    %1094 = vsyncpa [#allocation5], 1

</llo_original>
